<compile_context>
chip_gen: v6e
topology: v6e:2x2x1
jax: 0.10.0
libtpu: 0.0.40
codegen_flags: <defaults>
</compile_context>

<pallas_src>
import math
from typing import NamedTuple

import jax
import jax.numpy as jnp
from jax.experimental import pallas as pl
from jax.experimental.pallas import tpu as pltpu


def _round_up(x: int, n: int) -> int:
    return ((x + n - 1) // n) * n


def _sublane(dtype) -> int:
    # Minimum second-to-last block dim: 8 for 4-byte, 16 for 2-byte, 32 for 1-byte.
    return max(8, 32 // jnp.dtype(dtype).itemsize)


# -----------------------------------------------------------------------------
# Kernels
# -----------------------------------------------------------------------------
def _key_kernel_resident(x_ref, wt_ref, b_ref, o_ref):
    """Full-K linear tile: o = x @ Wt + b (f32 MXU accumulation)."""
    # Cast the activation tile in-register to the (possibly bf16) weight dtype:
    # no wrapper-side cast, so no extra HBM traffic.
    y = jnp.dot(x_ref[...].astype(wt_ref.dtype), wt_ref[...],
                preferred_element_type=jnp.float32)
    o_ref[...] = (y + b_ref[...].astype(jnp.float32)).astype(o_ref.dtype)


def _key_kernel_ktiled(x_ref, wt_ref, b_ref, o_ref, acc_ref):
    """K-tiled linear tile with f32 VMEM accumulator (K = last grid axis)."""
    k = pl.program_id(2)

    @pl.when(k == 0)
    def _():
        acc_ref[...] = jnp.zeros_like(acc_ref)

    acc_ref[...] += jnp.dot(x_ref[...].astype(wt_ref.dtype), wt_ref[...],
                            preferred_element_type=jnp.float32)

    @pl.when(k == pl.num_programs(2) - 1)
    def _():
        o_ref[...] = (acc_ref[...] + b_ref[...].astype(jnp.float32)
                      ).astype(o_ref.dtype)


# -----------------------------------------------------------------------------
# One-time parameter preparation (hoisted out of the per-call path)
# -----------------------------------------------------------------------------
class KeyParams(NamedTuple):
    wt: jax.Array      # (k_pad, n_pad) pre-transposed (+padded, +cast) weight
    b2: jax.Array      # (1, n_pad) f32 bias
    dim_input: int
    dim_attn: int
    tn: int
    tk: int
    n_pad: int
    k_pad: int


def prepare_key_params(w, b, *, param_dtype=None, block_n=512, block_k=512,
                       resident_weight_bytes=8 << 20) -> KeyParams:
    """Prepare nn.Linear params ONCE; reuse the result across key_forward calls.

    w: (dim_attn, dim_input)  -- PyTorch nn.Linear weight layout.
    b: (dim_attn,)
    param_dtype: optional storage/compute dtype for the weight (e.g. bf16).
    block_n / block_k: N / K tile sizes (multiples of 256 by default -> good
      fill of v6e/v7x 256x256 MXU, still legal on v5e's 128x128 MXU).
    resident_weight_bytes: keep the whole K extent as a single resident block
      while a (dim_input x tn) weight block stays under this many bytes.
    """
    d_attn, d_in = int(w.shape[0]), int(w.shape[1])
    wdtype = jnp.dtype(param_dtype) if param_dtype is not None else jnp.dtype(w.dtype)

    # ---- N (output feature) tiling ------------------------------------------
    if d_attn % 128 == 0:
        tn = min(block_n, d_attn)
        if d_attn % tn != 0:
            tn = 128                  # always divides since d_attn % 128 == 0
        n_pad = d_attn
    else:
        # Unpadded single N block (block dim == full array dim is always legal).
        # For tiny d_attn this avoids 128/d_attn output-write amplification and
        # the wrapper-side slice copy; masked stores are cheaper than 8x HBM.
        tn = n_pad = d_attn

    # ---- K (input feature) tiling --------------------------------------------
    if d_in * tn * wdtype.itemsize <= resident_weight_bytes:
        tk = k_pad = d_in             # single resident K block
    else:
        tk = min(block_k, _round_up(d_in, 128))
        k_pad = _round_up(d_in, tk)

    wt = jnp.asarray(w).T             # (d_in, d_attn): one-time transpose
    if k_pad != d_in or n_pad != d_attn:
        wt = jnp.pad(wt, ((0, k_pad - d_in), (0, n_pad - d_attn)))
    wt = wt.astype(wdtype)

    b2 = jnp.asarray(b)
    if n_pad != d_attn:
        b2 = jnp.pad(b2, (0, n_pad - d_attn))
    b2 = b2.astype(jnp.float32).reshape(1, n_pad)

    return KeyParams(wt=wt, b2=b2, dim_input=d_in, dim_attn=d_attn,
                     tn=tn, tk=tk, n_pad=n_pad, k_pad=k_pad)


# -----------------------------------------------------------------------------
# Forward
# -----------------------------------------------------------------------------
def key_forward(x, params: KeyParams, *, block_m=1024, out_dtype=None):
    """Pallas equivalent of Key.forward: x @ W^T + b.

    x: (..., dim_input); params: from prepare_key_params (prepared once).
    out_dtype: output dtype (default x.dtype); pass bf16 to halve writeback.
    returns: (..., dim_attn)
    """
    wt, b2 = params.wt, params.b2
    d_in, d_attn = params.dim_input, params.dim_attn
    tn, tk, n_pad, k_pad = params.tn, params.tk, params.n_pad, params.k_pad

    *lead, d_in_x = x.shape
    if d_in_x != d_in:
        raise ValueError(f"x last dim {d_in_x} != dim_input {d_in}")
    m = int(math.prod(lead)) if lead else 1
    out_dtype = jnp.dtype(out_dtype) if out_dtype is not None else jnp.dtype(x.dtype)

    # ---- M tiling: minimise row padding; split into a few blocks (when m is
    # ---- large enough) so both v7x TensorCores get "parallel" work.
    sub = max(_sublane(x.dtype), _sublane(out_dtype))
    m_blocks = pl.cdiv(m, block_m)
    m_blocks = max(m_blocks, min(4, pl.cdiv(m, 8 * sub)))
    tm = _round_up(pl.cdiv(m, m_blocks), sub)
    m_pad = m_blocks * tm

    x2d = x.reshape(m, d_in)
    if m_pad != m or k_pad != d_in:
        x2d = jnp.pad(x2d, ((0, m_pad - m), (0, k_pad - d_in)))

    n_blocks = n_pad // tn
    k_blocks = k_pad // tk
    weight_resident = (n_blocks == 1 and k_blocks == 1)

    x_bytes = jnp.dtype(x.dtype).itemsize
    w_bytes = jnp.dtype(wt.dtype).itemsize
    o_bytes = out_dtype.itemsize

    if k_blocks == 1:
        grid = (m_blocks, n_blocks)
        kernel = _key_kernel_resident
        if weight_resident:
            # Constant index_map => DMA'd once; single-buffer to halve the VMEM
            # held for the resident weight / bias.
            wt_spec = pl.BlockSpec((tk, tn), lambda i, j: (0, j),
                                   pipeline_mode=pl.Buffered(1))
            b_spec = pl.BlockSpec((1, tn), lambda i, j: (0, j),
                                  pipeline_mode=pl.Buffered(1))
        else:
            wt_spec = pl.BlockSpec((tk, tn), lambda i, j: (0, j))
            b_spec = pl.BlockSpec((1, tn), lambda i, j: (0, j))
        in_specs = [pl.BlockSpec((tm, tk), lambda i, j: (i, 0)), wt_spec, b_spec]
        out_spec = pl.BlockSpec((tm, tn), lambda i, j: (i, j))
        scratch_shapes = []
        dims = ("parallel", "parallel")
        acc_bytes = 0
        wt_bufs = 1 if weight_resident else 2
    else:
        grid = (m_blocks, n_blocks, k_blocks)
        kernel = _key_kernel_ktiled
        in_specs = [
            pl.BlockSpec((tm, tk), lambda i, j, k: (i, k)),
            pl.BlockSpec((tk, tn), lambda i, j, k: (k, j)),
            pl.BlockSpec((1, tn), lambda i, j, k: (0, j)),
        ]
        out_spec = pl.BlockSpec((tm, tn), lambda i, j, k: (i, j))
        scratch_shapes = [pltpu.VMEM((tm, tn), jnp.float32)]
        dims = ("parallel", "parallel", "arbitrary")
        acc_bytes = tm * tn * 4
        wt_bufs = 2

    # VMEM footprint (double-buffered streams + resident blocks + scratch) with
    # headroom; scoped defaults (16 MiB v5e / 32 MiB v6e,v7x) reject big tiles.
    footprint = (2 * tm * tk * x_bytes + wt_bufs * tk * tn * w_bytes
                 + 2 * tn * 4 + 2 * tm * tn * o_bytes + acc_bytes)
    vmem_limit = int(min(max(2 * footprint + (4 << 20), 16 << 20), 64 << 20))

    cost = pl.CostEstimate(
        flops=2 * m_pad * k_pad * n_pad,
        transcendentals=0,
        bytes_accessed=(m_pad * k_pad * x_bytes + k_pad * n_pad * w_bytes
                        + n_pad * 4 + m_pad * n_pad * o_bytes),
    )

    out2d = pl.pallas_call(
        kernel,
        out_shape=jax.ShapeDtypeStruct((m_pad, n_pad), out_dtype),
        grid=grid,
        in_specs=in_specs,
        out_specs=out_spec,
        scratch_shapes=scratch_shapes,
        compiler_params=pltpu.CompilerParams(
            dimension_semantics=dims,
            vmem_limit_bytes=vmem_limit,
        ),
        cost_estimate=cost,
    )(x2d, wt, b2)

    out = out2d
    if m_pad != m:
        out = out[:m]
    if n_pad != d_attn:
        out = out[:, :d_attn]
    return out.reshape(*lead, d_attn)


if __name__ == "__main__":
    # Small shapes consistent with the module: batch=2, seq=8, dim_input=32, dim_attn=16
    batch, seq, dim_input, dim_attn = 2, 8, 32, 16

    key = jax.random.PRNGKey(0)
    kx, kw, kb = jax.random.split(key, 3)

    x = jax.random.normal(kx, (batch, seq, dim_input), dtype=jnp.float32)

    # Deterministic PyTorch-style nn.Linear init bounds.
    bound = 1.0 / math.sqrt(dim_input)
    w = jax.random.uniform(kw, (dim_attn, dim_input), jnp.float32, -bound, bound)
    b = jax.random.uniform(kb, (dim_attn,), jnp.float32, -bound, bound)

    ref = x @ w.T + b

    # --- f32 path: params prepared once, reused across calls (resident weight,
    # --- single-buffered, unpadded 16-wide output -> no lane-pad amplification).
    params = prepare_key_params(w, b)
    out = jax.block_until_ready(key_forward(x, params))
    assert out.shape == (batch, seq, dim_attn)
    assert jnp.allclose(out, ref, atol=1e-5, rtol=1e-5)

    # --- bf16 weights + bf16 output: activation tile cast inside the kernel
    # --- (no wrapper-side astype), f32 MXU accumulation.
    params_bf16 = prepare_key_params(w, b, param_dtype=jnp.bfloat16)
    out_bf16 = jax.block_until_ready(
        key_forward(x, params_bf16, out_dtype=jnp.bfloat16))
    assert out_bf16.shape == (batch, seq, dim_attn)
    assert out_bf16.dtype == jnp.bfloat16
    assert jnp.allclose(out_bf16.astype(jnp.float32), ref, atol=3e-2, rtol=3e-2)

    # --- exercise the shape-general N/K-tiled accumulator path (forced tiling).
    d_in2, d_attn2 = 512, 256
    kx2, kw2, kb2 = jax.random.split(jax.random.PRNGKey(1), 3)
    x2 = jax.random.normal(kx2, (batch, seq, d_in2), dtype=jnp.float32)
    bound2 = 1.0 / math.sqrt(d_in2)
    w2 = jax.random.uniform(kw2, (d_attn2, d_in2), jnp.float32, -bound2, bound2)
    b2v = jax.random.uniform(kb2, (d_attn2,), jnp.float32, -bound2, bound2)
    ref2 = x2 @ w2.T + b2v
    params2 = prepare_key_params(w2, b2v, block_n=128, block_k=256,
                                 resident_weight_bytes=0)
    out2 = jax.block_until_ready(key_forward(x2, params2, block_m=8))
    assert out2.shape == (batch, seq, d_attn2)
    assert jnp.allclose(out2, ref2, atol=2e-3, rtol=2e-3)

    print("KERNEL_OK")
</pallas_src>

<mosaic_0001>
module attributes {stable_mosaic.version = 11 : i64} {
  func.func @_key_kernel_resident(%arg0: i32, %arg1: i32, %arg2: memref<16x32xf32, #tpu.memory_space<vmem>>, %arg3: memref<32x16xf32, #tpu.memory_space<vmem>>, %arg4: memref<1x16xf32, #tpu.memory_space<vmem>>, %arg5: memref<16x16xf32, #tpu.memory_space<vmem>>) attributes {dimension_semantics = [#tpu.dimension_semantics<parallel>, #tpu.dimension_semantics<parallel>], iteration_bounds = array<i64: 1, 1>, scalar_prefetch = 0 : i64, scratch_operands = 0 : i64, tpu.core_type = #tpu.core_type<tc>, window_params = [{transform_indices = @transform_0, window_bounds = array<i64: 16, 32>}, {pipeline_mode = #tpu.pipeline_mode<synchronous>, transform_indices = @transform_1, window_bounds = array<i64: 32, 16>}, {pipeline_mode = #tpu.pipeline_mode<synchronous>, transform_indices = @transform_2, window_bounds = array<i64: 1, 16>}, {transform_indices = @transform_3, window_bounds = array<i64: 16, 16>}]} {
    %c0 = arith.constant 0 : index
    %c0_0 = arith.constant 0 : index
    %0 = vector.load %arg2[%c0, %c0_0] : memref<16x32xf32, #tpu.memory_space<vmem>>, vector<16x32xf32>
    %c0_1 = arith.constant 0 : index
    %c0_2 = arith.constant 0 : index
    %1 = vector.load %arg3[%c0_1, %c0_2] : memref<32x16xf32, #tpu.memory_space<vmem>>, vector<32x16xf32>
    %cst = arith.constant dense<0.000000e+00> : vector<16x16xf32>
    %2 = tpu.matmul %0, %1, %cst {dimension_numbers = #tpu.dot_dimension_numbers<[1], [0], [0], [1], [0, 0, 1, 1], [], []>} : vector<16x32xf32>, vector<32x16xf32>, vector<16x16xf32> -> vector<16x16xf32>
    %c0_3 = arith.constant 0 : index
    %c0_4 = arith.constant 0 : index
    %3 = vector.load %arg4[%c0_3, %c0_4] : memref<1x16xf32, #tpu.memory_space<vmem>>, vector<1x16xf32>
    %4 = vector.broadcast %3 : vector<1x16xf32> to vector<16x16xf32>
    %5 = arith.addf %2, %4 : vector<16x16xf32>
    %c0_5 = arith.constant 0 : index
    %c0_6 = arith.constant 0 : index
    %6 = vector.load %arg5[%c0_5, %c0_6] : memref<16x16xf32, #tpu.memory_space<vmem>>, vector<16x16xf32>
    tpu.vector_store %arg5[%c0_5, %c0_6], %5 {strides = array<i32>} : memref<16x16xf32, #tpu.memory_space<vmem>>, vector<16x16xf32>,
    return
  }
  func.func @transform_0(%arg0: i32, %arg1: i32) -> (i32, i32) {
    %c0_i32 = arith.constant 0 : i32
    %c0_i32_0 = arith.constant 0 : i32
    return %arg0, %c0_i32 : i32, i32
  }
  func.func @transform_1(%arg0: i32, %arg1: i32) -> (i32, i32) {
    %c0_i32 = arith.constant 0 : i32
    %c0_i32_0 = arith.constant 0 : i32
    return %c0_i32, %arg1 : i32, i32
  }
  func.func @transform_2(%arg0: i32, %arg1: i32) -> (i32, i32) {
    %c0_i32 = arith.constant 0 : i32
    %c0_i32_0 = arith.constant 0 : i32
    return %c0_i32, %arg1 : i32, i32
  }
  func.func @transform_3(%arg0: i32, %arg1: i32) -> (i32, i32) {
    %c0_i32 = arith.constant 0 : i32
    return %arg0, %arg1 : i32, i32
  }
}

</mosaic_0001>

<llo_original>
// kernel: tpu_custom_call.1
$region0: #{tpu_custom_call.1}
  #allocation0 [shape = 'u32[]', space=smem, size = 0x4, offset = 0x4, fixed_abs, tag = 'smem constant byte address 0x4 - core index']
  #allocation1 [shape = 'u32[144,128]{1,0:T(1,128)}', space=vmem, size = 0x12000, scoped, tag = 'internal scratch']
  %s0 = inlined_call_operand.vmem [shape: f32[16,32], index: 0, kind: input, shape index: {}]
  %s1 = inlined_call_operand.vmem [shape: f32[32,16], index: 1, kind: input, shape index: {}]
  %s2 = inlined_call_operand.vmem [shape: f32[1,16], index: 2, kind: input, shape index: {}]
  %s3 = inlined_call_operand.hbm [shape: f32[16,16], index: 3, kind: output, shape index: {}]
  %s4 = sld [smem:[#allocation0]]
  $region22: #{tpu_custom_call.1} parent=0
    _
  %s6 = ssub.s32 1, %s4
  %s7 = scalar_select 0, %s6, %s4
  $region1: #{tpu_custom_call.1} parent=0
    #allocation2 [shape = 'u8[8192]{0}', space=vmem, size = 0x2000, scoped, tag = 'output window, operand 0, single buffered']
    #allocation3 [shape = 's32[1]{0}', space=sflag, size = 0x4, scoped, tag = 'scoped memory for tpu_custom_call.1']
    %8 = vsyncpa [#allocation3], 0
    // Predicated region
    $region2: #{tpu_custom_call.1} parent=1 // pred_check
      _
    $region3: #{tpu_custom_call.1} parent=1 // pred_check_branch
      %10 = sbr.rel (0) target = $region5
    $region4: #{tpu_custom_call.1} parent=1 // pred_region
      _
    $region5: #{tpu_custom_call.1} parent=1 // pred_fallthru
      _
    // Predicated region
    $region6: #{tpu_custom_call.1} parent=1 // pred_check
      _
    $region7: #{tpu_custom_call.1} parent=1 // pred_check_branch
      %12 = sbr.rel (0) target = $region9
    $region8: #{tpu_custom_call.1} parent=1 // pred_region
      _
    $region9: #{tpu_custom_call.1} parent=1 // pred_fallthru
      _
    // Predicated region
    $region10: #{tpu_custom_call.1} parent=1 // pred_check
      _
    $region11: #{tpu_custom_call.1} parent=1 // pred_check_branch
      %14 = sbr.rel (0) target = $region13
    $region12: #{tpu_custom_call.1} parent=1 // pred_region
      _
    $region13: #{tpu_custom_call.1} parent=1 // pred_fallthru
      _
    %v15 = vld [vmem:[%s0] sm:$0xff]
    %v16 = vld [vmem:[%s0 + $0x8] sm:$0xff]
    %v17 = vld [vmem:[%s1] sm:$0xff]
    %v18 = vld [vmem:[%s1 + $0x8] sm:$0xff]
    %v19 = vld [vmem:[%s1 + $0x10] sm:$0xff]
    %v20 = vld [vmem:[%s1 + $0x18] sm:$0xff]
    %v21 = vld [vmem:[%s2] sm:$0x1]
    %v23 = vlaneseq
    %v24 = vshrl.u32 %v23, 7
    %v25 = vsub.s32 0, %v24
    %v26 = vrot.slane %v21, %v25
    %vm28 = vcmask 261120
    %v30 = vsel %vm28, %v15, 0
    %v33 = vsel %vm28, %v16, 0
    %35 = vmatprep.subr.mxu0 0.0
    %36 = vmatpush1.msra.mxu0 0.0
    %37 = vmatprep.subr.mxu0 0.0
    %38 = vmatpush1.msra.mxu0 0.0
    %39 = vmatprep.subr.mxu0 0.0
    %40 = vmatpush1.msra.mxu0 0.0
    %41 = vmatprep.subr.mxu0 0.0
    %42 = vmatpush1.msra.mxu0 0.0
    %43 = vmatprep.subr.mxu0 0.0
    %44 = vmatpush1.msra.mxu0 0.0
    %45 = vmatprep.subr.mxu0 0.0
    %46 = vmatpush1.msra.mxu0 0.0
    %47 = vmatprep.subr.mxu0 0.0
    %48 = vmatpush1.msra.mxu0 0.0
    %49 = vmatprep.subr.mxu0 0.0
    %50 = vmatpush1.msra.mxu0 0.0
    %51 = vmatprep.subr.mxu0 0.0
    %52 = vmatpush1.msra.mxu0 0.0
    %53 = vmatprep.subr.mxu0 0.0
    %54 = vmatpush1.msra.mxu0 0.0
    %55 = vmatprep.subr.mxu0 0.0
    %56 = vmatpush1.msra.mxu0 0.0
    %57 = vmatprep.subr.mxu0 0.0
    %58 = vmatpush1.msra.mxu0 0.0
    %59 = vmatprep.subr.mxu0 0.0
    %60 = vmatpush1.msra.mxu0 %v20
    %61 = vmatprep.subr.mxu0 0.0
    %62 = vmatpush1.msra.mxu0 %v19
    %63 = vmatprep.subr.mxu0 0.0
    %64 = vmatpush1.msra.mxu0 %v18
    %65 = vmatprep.subr.mxu0 0.0
    %66 = vmatpush1.msra.mxu0 %v17
    %67 = vmatprep.subr.mxu0 0.0
    %68 = vmatpush2.msra.mxu0 0.0
    %69 = vmatprep.subr.mxu0 0.0
    %70 = vmatpush2.msra.mxu0 0.0
    %71 = vmatprep.subr.mxu0 0.0
    %72 = vmatpush2.msra.mxu0 0.0
    %73 = vmatprep.subr.mxu0 0.0
    %74 = vmatpush2.msra.mxu0 0.0
    %75 = vmatprep.subr.mxu0 0.0
    %76 = vmatpush2.msra.mxu0 0.0
    %77 = vmatprep.subr.mxu0 0.0
    %78 = vmatpush2.msra.mxu0 0.0
    %79 = vmatprep.subr.mxu0 0.0
    %80 = vmatpush2.msra.mxu0 0.0
    %81 = vmatprep.subr.mxu0 0.0
    %82 = vmatpush2.msra.mxu0 0.0
    %83 = vmatprep.subr.mxu0 0.0
    %84 = vmatpush2.msra.mxu0 0.0
    %85 = vmatprep.subr.mxu0 0.0
    %86 = vmatpush2.msra.mxu0 0.0
    %87 = vmatprep.subr.mxu0 0.0
    %88 = vmatpush2.msra.mxu0 0.0
    %89 = vmatprep.subr.mxu0 0.0
    %90 = vmatpush2.msra.mxu0 0.0
    %91 = vmatprep.subr.mxu0 0.0
    %92 = vmatpush2.msra.mxu0 0.0
    %93 = vmatprep.subr.mxu0 0.0
    %94 = vmatpush2.msra.mxu0 0.0
    %95 = vmatprep.subr.mxu0 0.0
    %96 = vmatpush2.msra.mxu0 0.0
    %97 = vmatprep.subr.mxu0 0.0
    %98 = vmatpush2.msra.mxu0 0.0
    %99 = vmatprep.mubr.f32.mxu0 0.0
    %100 = vmatmul.mubr.f32.gmra.mxu0 %v30
    %v101 = vpop.f32.mrf.mxu0
    %v102 = vadd.f32 %v26, %v101
    %v103 = vpop.f32.mrf.mxu0
    %104 = vmatprep.mubr.f32.mxu0 0.0
    %105 = vmatmul.mubr.f32.gmra.mxu0 %v33
    %v106 = vpop.f32.mrf.mxu0
    %v107 = vadd.f32 %v26, %v106
    %v108 = vpop.f32.mrf.mxu0
    %109 = vdwg.mxu0
    %vm110 = vcmask 130048
    %111 = vst.msk [vmem:[#allocation2] sm:$0xff] %vm110, %v102
    %112 = vst.msk [vmem:[#allocation2 + $0x8] sm:$0xff] %vm110, %v107
    // Predicated region
    $region14: #{tpu_custom_call.1} parent=1 // pred_check
      _
    $region15: #{tpu_custom_call.1} parent=1 // pred_check_branch
      %114 = sbr.rel (0) target = $region17
    $region16: #{tpu_custom_call.1} parent=1 // pred_region
      %s116 = ssub.s32 256, 256
      %117 = vsyncadd [#allocation3], %s116
      %s118 = sshll.u32 [#allocation2], 4
      %s119 = int_to_ptr.vmem [resolvable:$true] %s118
      %124 = dma.vmem_to_hbm [thread:$0]  %s119, 256, %s3, [#allocation3], 128, 128, 8
    $region17: #{tpu_custom_call.1} parent=1 // pred_fallthru
      _
    // Predicated region
    $region18: #{tpu_custom_call.1} parent=1 // pred_check
      _
    $region19: #{tpu_custom_call.1} parent=1 // pred_check_branch
      %126 = sbr.rel (0) target = $region21
    $region20: #{tpu_custom_call.1} parent=1 // pred_region
      %127 = dma.done [#allocation3], 256
    $region21: #{tpu_custom_call.1} parent=1 // pred_fallthru
      _
    %128 = vsyncpa [#allocation3], 1

</llo_original>
